<compile_context>
chip_gen: v6e
topology: v6e:2x2x1
jax: 0.10.0
libtpu: 0.0.40
codegen_flags: <defaults>
</compile_context>

<pallas_src>
import functools
import numpy as np

import jax
import jax.numpy as jnp
from jax.experimental import pallas as pl
from jax.experimental.pallas import tpu as pltpu


def _round_up(x, m):
    return (x + m - 1) // m * m


def _pick_row_tile(Ho, Wo, target_rows=512):
    """Largest divisor TH of Ho with TH*Wo <= target_rows (at least 1 row)."""
    best = 1
    for d in range(1, Ho + 1):
        if Ho % d == 0 and d * Wo <= target_rows:
            best = d
    return best


def _padded_vmem_bytes(shape, dtype, buffers):
    """Approximate VMEM footprint incl. (8 sublane, 128 lane) layout padding."""
    s = list(shape)
    if len(s) >= 1:
        s[-1] = _round_up(s[-1], 128)
    if len(s) >= 2:
        s[-2] = _round_up(s[-2], 8)
    return int(np.prod(s)) * jnp.dtype(dtype).itemsize * buffers


def _spec(block_shape, index_map, single_buffer=False):
    """BlockSpec helper: grid-invariant blocks get a single pipeline buffer."""
    if single_buffer:
        try:
            return pl.BlockSpec(block_shape, index_map,
                                pipeline_mode=pl.Buffered(1))
        except (AttributeError, TypeError):
            pass  # older API: fall back to the default double buffer
    return pl.BlockSpec(block_shape, index_map)


def _conv_kernel(x_ref, w_ref, b_ref, o_ref, *, TH, Wo, KKC, Cout, apply_relu):
    # x_ref : (1, TH, Wo, KKC)   im2col row-band tile (lane axis = K*K*Cin)
    # w_ref : (KKC, Cout)        folded weights
    # b_ref : (1, Cout)          f32 bias
    # o_ref : (1, TH, Wo, Cout)  output row band
    patch = x_ref[...].reshape(TH * Wo, KKC)
    acc = jnp.dot(patch, w_ref[...], preferred_element_type=jnp.float32)
    acc = acc + b_ref[...]                    # bias in f32 (vreg-resident)
    if apply_relu:
        acc = jnp.maximum(acc, 0.0)
    o_ref[...] = acc.reshape(1, TH, Wo, Cout).astype(o_ref.dtype)


def conv_layer_forward_nhwc(x_nhwc, weight, bias, *, kernel_size, stride,
                            is_last=False, compute_dtype=None):
    """ReflectionPad2d(floor(k/2)) -> Conv2d(k, stride) -> ReLU (unless is_last).

    x_nhwc: [N, H, W, Cin], weight: [Cout, Cin, K, K] (PyTorch OIHW), bias: [Cout].
    Returns [N, Ho, Wo, Cout] (NHWC).  compute_dtype=jnp.bfloat16 runs the MXU
    with bf16 operands and f32 accumulation (recommended on v5e/v6e/v7x).
    """
    N, H, W, Cin = x_nhwc.shape
    Cout = weight.shape[0]
    K = int(kernel_size)
    stride = int(stride)
    pad = K // 2  # floor(K/2): exact match of the module geometry

    out_dtype = x_nhwc.dtype
    cd = jnp.dtype(compute_dtype) if compute_dtype is not None else jnp.dtype(out_dtype)

    # Reflection padding (matches torch.nn.ReflectionPad2d).
    xp = jnp.pad(x_nhwc, ((0, 0), (pad, pad), (pad, pad), (0, 0)), mode="reflect")
    Hp, Wp = H + 2 * pad, W + 2 * pad
    Ho = (Hp - K) // stride + 1
    Wo = (Wp - K) // stride + 1

    # Wrapper-level im2col / space-to-depth: fold (kh, kw) and the stride into
    # the channel (lane) axis so the kernel needs no shifted or strided slices.
    cols = []
    for kh in range(K):
        for kw in range(K):
            cols.append(xp[:, kh: kh + (Ho - 1) * stride + 1: stride,
                           kw: kw + (Wo - 1) * stride + 1: stride, :])
    x_col = jnp.concatenate(cols, axis=-1).astype(cd)      # (N, Ho, Wo, K*K*Cin)
    KKC = K * K * Cin

    # OIHW -> (K*K*Cin, Cout); contraction index = (kh*K + kw)*Cin + c.
    w = jnp.transpose(weight, (2, 3, 1, 0)).reshape(KKC, Cout).astype(cd)
    b = bias.astype(jnp.float32).reshape(1, Cout)

    TH = _pick_row_tile(Ho, Wo)          # TH*Wo ~ 512 rows per MXU contraction
    Ht = Ho // TH

    # VMEM budget with physical layout padding; clamp to ~75% of hardware VMEM.
    vmem_need = (_padded_vmem_bytes((TH, Wo, KKC), cd, 2)          # x tile, 2 bufs
                 + _padded_vmem_bytes((KKC, Cout), cd, 1)          # weights, 1 buf
                 + _padded_vmem_bytes((1, Cout), jnp.float32, 1)   # bias, 1 buf
                 + _padded_vmem_bytes((TH, Wo, Cout), out_dtype, 2))  # out, 2 bufs
    try:
        physical_vmem = int(pltpu.get_tpu_info().vmem_capacity_bytes)
    except Exception:
        physical_vmem = 64 * 2 ** 20     # conservative: v7x per-TensorCore VMEM
    vmem_limit = int(min(max(2 * vmem_need, 32 * 2 ** 20),
                         int(0.75 * physical_vmem)))

    in_isz = jnp.dtype(cd).itemsize
    out_isz = jnp.dtype(out_dtype).itemsize
    cost = pl.CostEstimate(
        flops=2 * N * Ho * Wo * KKC * Cout,
        transcendentals=0,
        bytes_accessed=int(x_col.size * in_isz + w.size * in_isz + b.size * 4
                           + N * Ho * Wo * Cout * out_isz))

    kernel = functools.partial(_conv_kernel, TH=TH, Wo=Wo, KKC=KKC, Cout=Cout,
                               apply_relu=not is_last)

    out = pl.pallas_call(
        kernel,
        out_shape=jax.ShapeDtypeStruct((N, Ho, Wo, Cout), out_dtype),
        grid_spec=pltpu.PrefetchScalarGridSpec(
            num_scalar_prefetch=0,
            grid=(N, Ht),
            in_specs=[
                _spec((1, TH, Wo, KKC), lambda n, t: (n, t, 0, 0)),
                _spec((KKC, Cout), lambda n, t: (0, 0), single_buffer=True),
                _spec((1, Cout), lambda n, t: (0, 0), single_buffer=True),
            ],
            out_specs=pl.BlockSpec((1, TH, Wo, Cout), lambda n, t: (n, t, 0, 0)),
        ),
        compiler_params=pltpu.CompilerParams(
            dimension_semantics=("parallel", "parallel"),
            vmem_limit_bytes=vmem_limit),
        cost_estimate=cost,
    )(x_col, w, b)
    return out


def conv_layer_forward(x_nchw, weight, bias, *, kernel_size, stride,
                       is_last=False, compute_dtype=None):
    """PyTorch-layout wrapper: [N, Cin, H, W] -> [N, Cout, Ho, Wo].
    For multi-layer nets prefer conv_layer_forward_nhwc and stay NHWC
    end-to-end to avoid per-layer HBM transposes."""
    x = jnp.transpose(x_nchw, (0, 2, 3, 1))
    out = conv_layer_forward_nhwc(x, weight, bias, kernel_size=kernel_size,
                                  stride=stride, is_last=is_last,
                                  compute_dtype=compute_dtype)
    return jnp.transpose(out, (0, 3, 1, 2))


def _reference(x_nchw, weight, bias, *, kernel_size, stride, is_last):
    pad = kernel_size // 2
    xp = jnp.pad(x_nchw, ((0, 0), (0, 0), (pad, pad), (pad, pad)), mode="reflect")
    out = jax.lax.conv_general_dilated(
        xp, weight, window_strides=(stride, stride), padding="VALID",
        dimension_numbers=("NCHW", "OIHW", "NCHW"))
    out = out + bias[None, :, None, None]
    if not is_last:
        out = jnp.maximum(out, 0.0)
    return out


if __name__ == "__main__":
    # Small deterministic setup consistent with the module's constructor.
    N, Cin, H, W = 2, 4, 16, 16
    Cout, K = 8, 3

    key = jax.random.PRNGKey(0)
    kx, kw_, kb = jax.random.split(key, 3)

    x = jax.random.normal(kx, (N, Cin, H, W), dtype=jnp.float32)

    # Deterministic Conv2d-style init: U(-bound, bound), bound = 1/sqrt(fan_in).
    fan_in = Cin * K * K
    bound = 1.0 / np.sqrt(fan_in)
    weight = jax.random.uniform(kw_, (Cout, Cin, K, K), jnp.float32,
                                minval=-bound, maxval=bound)
    bias = jax.random.uniform(kb, (Cout,), jnp.float32,
                              minval=-bound, maxval=bound)

    # Case 1: stride=1, ReLU (typical mid-network layer), f32 exact vs XLA ref.
    ref = jax.block_until_ready(
        _reference(x, weight, bias, kernel_size=K, stride=1, is_last=False))
    out = jax.block_until_ready(
        conv_layer_forward(x, weight, bias, kernel_size=K, stride=1,
                           is_last=False))
    assert out.shape == ref.shape, (out.shape, ref.shape)
    np.testing.assert_allclose(np.asarray(out), np.asarray(ref),
                               rtol=1e-4, atol=1e-4)

    # Case 2: bf16 operands (recommended on v5e/v6e/v7x), f32 accumulation.
    out_bf16 = jax.block_until_ready(
        conv_layer_forward(x, weight, bias, kernel_size=K, stride=1,
                           is_last=False, compute_dtype=jnp.bfloat16))
    np.testing.assert_allclose(np.asarray(out_bf16), np.asarray(ref),
                               rtol=5e-2, atol=5e-2)

    # Case 3: stride=2 downsampling layer, is_last=True (no ReLU).
    ref2 = jax.block_until_ready(
        _reference(x, weight, bias, kernel_size=K, stride=2, is_last=True))
    out2 = jax.block_until_ready(
        conv_layer_forward(x, weight, bias, kernel_size=K, stride=2,
                           is_last=True))
    assert out2.shape == ref2.shape, (out2.shape, ref2.shape)
    np.testing.assert_allclose(np.asarray(out2), np.asarray(ref2),
                               rtol=1e-4, atol=1e-4)

    print("KERNEL_OK")
</pallas_src>

<mosaic_0001>
module attributes {stable_mosaic.version = 11 : i64} {
  func.func @_conv_kernel(%arg0: i32, %arg1: i32, %arg2: memref<1x16x16x36xf32, #tpu.memory_space<vmem>>, %arg3: memref<36x8xf32, #tpu.memory_space<vmem>>, %arg4: memref<1x8xf32, #tpu.memory_space<vmem>>, %arg5: memref<1x16x16x8xf32, #tpu.memory_space<vmem>>) attributes {dimension_semantics = [#tpu.dimension_semantics<parallel>, #tpu.dimension_semantics<parallel>], iteration_bounds = array<i64: 2, 1>, scalar_prefetch = 0 : i64, scratch_operands = 0 : i64, tpu.core_type = #tpu.core_type<tc>, window_params = [{transform_indices = @transform_0, window_bounds = array<i64: 1, 16, 16, 36>}, {pipeline_mode = #tpu.pipeline_mode<synchronous>, transform_indices = @transform_1, window_bounds = array<i64: 36, 8>}, {pipeline_mode = #tpu.pipeline_mode<synchronous>, transform_indices = @transform_2, window_bounds = array<i64: 1, 8>}, {transform_indices = @transform_3, window_bounds = array<i64: 1, 16, 16, 8>}]} {
    %c0 = arith.constant 0 : index
    %c0_0 = arith.constant 0 : index
    %c0_1 = arith.constant 0 : index
    %c0_2 = arith.constant 0 : index
    %0 = vector.load %arg2[%c0, %c0_0, %c0_1, %c0_2] : memref<1x16x16x36xf32, #tpu.memory_space<vmem>>, vector<1x16x16x36xf32>
    %1 = vector.shape_cast %0 : vector<1x16x16x36xf32> to vector<256x36xf32>
    %c0_3 = arith.constant 0 : index
    %c0_4 = arith.constant 0 : index
    %2 = vector.load %arg3[%c0_3, %c0_4] : memref<36x8xf32, #tpu.memory_space<vmem>>, vector<36x8xf32>
    %cst = arith.constant dense<0.000000e+00> : vector<256x8xf32>
    %3 = tpu.matmul %1, %2, %cst {dimension_numbers = #tpu.dot_dimension_numbers<[1], [0], [0], [1], [0, 0, 1, 1], [], []>} : vector<256x36xf32>, vector<36x8xf32>, vector<256x8xf32> -> vector<256x8xf32>
    %c0_5 = arith.constant 0 : index
    %c0_6 = arith.constant 0 : index
    %4 = vector.load %arg4[%c0_5, %c0_6] : memref<1x8xf32, #tpu.memory_space<vmem>>, vector<1x8xf32>
    %5 = vector.broadcast %4 : vector<1x8xf32> to vector<256x8xf32>
    %6 = arith.addf %3, %5 : vector<256x8xf32>
    %cst_7 = arith.constant 0.000000e+00 : f32
    %7 = vector.broadcast %cst_7 : f32 to vector<256x8xf32>
    %8 = arith.maximumf %6, %7 : vector<256x8xf32>
    %9 = vector.shape_cast %8 : vector<256x8xf32> to vector<1x16x16x8xf32>
    %c0_8 = arith.constant 0 : index
    %c0_9 = arith.constant 0 : index
    %c0_10 = arith.constant 0 : index
    %c0_11 = arith.constant 0 : index
    %10 = vector.load %arg5[%c0_8, %c0_9, %c0_10, %c0_11] : memref<1x16x16x8xf32, #tpu.memory_space<vmem>>, vector<1x16x16x8xf32>
    tpu.vector_store %arg5[%c0_8, %c0_9, %c0_10, %c0_11], %9 {strides = array<i32>} : memref<1x16x16x8xf32, #tpu.memory_space<vmem>>, vector<1x16x16x8xf32>,
    return
  }
  func.func @transform_0(%arg0: i32, %arg1: i32) -> (i32, i32, i32, i32) {
    %c0_i32 = arith.constant 0 : i32
    %c0_i32_0 = arith.constant 0 : i32
    %c0_i32_1 = arith.constant 0 : i32
    return %arg0, %arg1, %c0_i32, %c0_i32_0 : i32, i32, i32, i32
  }
  func.func @transform_1(%arg0: i32, %arg1: i32) -> (i32, i32) {
    %c0_i32 = arith.constant 0 : i32
    %c0_i32_0 = arith.constant 0 : i32
    %c0_i32_1 = arith.constant 0 : i32
    return %c0_i32, %c0_i32_0 : i32, i32
  }
  func.func @transform_2(%arg0: i32, %arg1: i32) -> (i32, i32) {
    %c0_i32 = arith.constant 0 : i32
    %c0_i32_0 = arith.constant 0 : i32
    %c0_i32_1 = arith.constant 0 : i32
    return %c0_i32, %c0_i32_0 : i32, i32
  }
  func.func @transform_3(%arg0: i32, %arg1: i32) -> (i32, i32, i32, i32) {
    %c0_i32 = arith.constant 0 : i32
    %c0_i32_0 = arith.constant 0 : i32
    %c0_i32_1 = arith.constant 0 : i32
    return %arg0, %arg1, %c0_i32, %c0_i32_0 : i32, i32, i32, i32
  }
}

</mosaic_0001>

<llo_original>
// kernel: tpu_custom_call.1
$region0: #{tpu_custom_call.1}
  #allocation0 [shape = 'u32[]', space=smem, size = 0x4, offset = 0x4, fixed_abs, tag = 'smem constant byte address 0x4 - core index']
  #allocation1 [shape = 'u32[144,128]{1,0:T(1,128)}', space=vmem, size = 0x12000, scoped, tag = 'internal scratch']
  %s0 = inlined_call_operand.hbm [shape: f32[2,16,16,36], index: 0, kind: input, shape index: {}]
  %s1 = inlined_call_operand.vmem [shape: f32[36,8], index: 1, kind: input, shape index: {}]
  %s2 = inlined_call_operand.vmem [shape: f32[1,8], index: 2, kind: input, shape index: {}]
  %s3 = inlined_call_operand.vmem [shape: f32[2,16,16,8], index: 3, kind: output, shape index: {}]
  %s4 = sld [smem:[#allocation0]]
  $region49: #{tpu_custom_call.1} parent=0
    _
  %s6 = ssub.s32 1, %s4
  %s7 = scalar_select 0, %s6, %s4
  $region1: #{tpu_custom_call.1} parent=0
    #allocation2 [shape = 'u8[262144]{0}', space=vmem, size = 0x40000, scoped, tag = 'input window, operand 0']
    #allocation3 [shape = 's32[2]{0}', space=sflag, size = 0x8, scoped, tag = 'scoped memory for tpu_custom_call.1']
    %8 = vsyncpa [#allocation3], 0
    %s9 = scalar_lea.sflag [#allocation3], 1
    %10 = vsyncpa %s9, 0
    loop: start=0, step=1, limit=4
    $region2: #{tpu_custom_call.1} parent=1 // loop_pre_header
      _
    $region3: #{tpu_custom_call.1} parent=1 // loop_header
      %s12 = sphi 0, %s16
      %p13 = scmp.ge.s32.totalorder %s12, 4
      %s19 = sphi 0, %s31
      %s20 = sphi 0, %s27
      %s21 = sphi 0, %s19
      %s22 = sphi 0, %s20
      %s23 = sphi 0, %s21
      %s24 = sphi 0, %s22
      %s36 = sphi 0, %s38
      %s39 = sphi 0, %s36
      %s40 = sphi 0, %s39
      %s56 = sphi 0, %s40
      %s60 = sphi 0, %s60
      %s62 = sphi 0, %s60
      %s63 = sphi 0, %s62
      %s77 = sphi 0, %s63
      %s81 = sphi 0, %s81
      %s83 = sphi 0, %s81
      %s84 = sphi 0, %s83
      %s98 = sphi 0, %s84
      %s106 = sphi 0, %s108
      %s109 = sphi 0, %s106
      %s110 = sphi 0, %s109
      %s126 = sphi 0, %s110
    $region4: #{tpu_custom_call.1} parent=1 // loop_header_branch
      %15 = sbr.rel (%p13) target = $region8
    $region5: #{tpu_custom_call.1} parent=1 // loop_body
      %s17 = ssub.s32 %s12, 1
      %s18 = ssub.s32 %s12, 2
      %s25 = sadd.s32 1, %s20
      %p26 = scmp.ge.s32.totalorder %s25, 1
      %s27 = scalar_select %p26, 0, %s25
      %s28 = sadd.s32 1, %s19
      %s29 = scalar_select %p26, %s28, %s19
      %p30 = scmp.ge.s32.totalorder %s29, 2
      %s31 = scalar_select %p30, 0, %s29
      %s32 = ssub.s32 %s19, %s31
      %s33 = ssub.s32 %s20, %s27
      %s34 = sor.u32 %s32, %s33
      %p35 = scmp.eq.s32.totalorder %s34, 0
      %s37 = sadd.s32 %s36, 1
      %s38 = scalar_select %p35, %s36, %s37
      %p41 = pneg %p35
      %p42 = scmp.eq.s32.totalorder %s12, 1
      %p43 = por %p41, %p42
      %p44 = scmp.ne.s32.totalorder %s36, %s39
      %p45 = scmp.eq.s32.totalorder %s12, 0
      %p46 = por %p44, %p45
      %p47 = scmp.ne.s32.totalorder %s36, %s39
      %p48 = scmp.eq.s32.totalorder %s17, 1
      %p49 = por %p47, %p48
      %p50 = scmp.ne.s32.totalorder %s39, %s40
      %p51 = scmp.eq.s32.totalorder %s17, 0
      %p52 = por %p50, %p51
      %p53 = scmp.ne.s32.totalorder %s39, %s40
      %p54 = scmp.eq.s32.totalorder %s18, 1
      %p55 = por %p53, %p54
      %p57 = scmp.ne.s32.totalorder %s40, %s56
      %p58 = scmp.eq.s32.totalorder %s18, 0
      %p59 = por %p57, %p58
      %s61 = sadd.s32 %s60, 1
      %p64 = scmp.eq.s32.totalorder %s12, 1
      %p65 = scmp.ne.s32.totalorder %s60, %s62
      %p66 = scmp.eq.s32.totalorder %s12, 0
      %p67 = por %p65, %p66
      %p68 = scmp.ne.s32.totalorder %s60, %s62
      %p69 = scmp.eq.s32.totalorder %s17, 1
      %p70 = por %p68, %p69
      %p71 = scmp.ne.s32.totalorder %s62, %s63
      %p72 = scmp.eq.s32.totalorder %s17, 0
      %p73 = por %p71, %p72
      %p74 = scmp.ne.s32.totalorder %s62, %s63
      %p75 = scmp.eq.s32.totalorder %s18, 1
      %p76 = por %p74, %p75
      %p78 = scmp.ne.s32.totalorder %s63, %s77
      %p79 = scmp.eq.s32.totalorder %s18, 0
      %p80 = por %p78, %p79
      %s82 = sadd.s32 %s81, 1
      %p85 = scmp.eq.s32.totalorder %s12, 1
      %p86 = scmp.ne.s32.totalorder %s81, %s83
      %p87 = scmp.eq.s32.totalorder %s12, 0
      %p88 = por %p86, %p87
      %p89 = scmp.ne.s32.totalorder %s81, %s83
      %p90 = scmp.eq.s32.totalorder %s17, 1
      %p91 = por %p89, %p90
      %p92 = scmp.ne.s32.totalorder %s83, %s84
      %p93 = scmp.eq.s32.totalorder %s17, 0
      %p94 = por %p92, %p93
      %p95 = scmp.ne.s32.totalorder %s83, %s84
      %p96 = scmp.eq.s32.totalorder %s18, 1
      %p97 = por %p95, %p96
      %p99 = scmp.ne.s32.totalorder %s84, %s98
      %p100 = scmp.eq.s32.totalorder %s18, 0
      %p101 = por %p99, %p100
      %s102 = ssub.s32 %s19, %s31
      %s103 = ssub.s32 %s20, %s27
      %s104 = sor.u32 %s102, %s103
      %p105 = scmp.eq.s32.totalorder %s104, 0
      %s107 = sadd.s32 %s106, 1
      %s108 = scalar_select %p105, %s106, %s107
      %p111 = pneg %p105
      %p112 = scmp.eq.s32.totalorder %s12, 1
      %p113 = por %p111, %p112
      %p114 = scmp.ne.s32.totalorder %s106, %s109
      %p115 = scmp.eq.s32.totalorder %s12, 0
      %p116 = por %p114, %p115
      %p117 = scmp.ne.s32.totalorder %s106, %s109
      %p118 = scmp.eq.s32.totalorder %s17, 1
      %p119 = por %p117, %p118
      %p120 = scmp.ne.s32.totalorder %s109, %s110
      %p121 = scmp.eq.s32.totalorder %s17, 0
      %p122 = por %p120, %p121
      %p123 = scmp.ne.s32.totalorder %s109, %s110
      %p124 = scmp.eq.s32.totalorder %s18, 1
      %p125 = por %p123, %p124
      %p127 = scmp.ne.s32.totalorder %s110, %s126
      %p128 = scmp.eq.s32.totalorder %s18, 0
      %p129 = por %p127, %p128
      %p130 = scmp.le.s32.totalorder 1, %s12
      %p131 = scmp.lt.s32.totalorder %s12, 3
      %p132 = pnand %p130, %p131
      %p133 = pneg %p132
      // Predicated region
      $region9: #{tpu_custom_call.1} parent=5 // pred_check
        _
      $region10: #{tpu_custom_call.1} parent=5 // pred_check_branch
        %135 = sbr.rel (%p132) target = $region12
      $region11: #{tpu_custom_call.1} parent=5 // pred_region
        %s136 = ssub.s32 %s12, 1
        // Predicated region
        $region13: #{tpu_custom_call.1} parent=11 // pred_check
          %p137 = pneg %p73
        $region14: #{tpu_custom_call.1} parent=11 // pred_check_branch
          %139 = sbr.rel (%p137) target = $region16
        $region15: #{tpu_custom_call.1} parent=11 // pred_region
          _
        $region16: #{tpu_custom_call.1} parent=11 // pred_fallthru
          _
        // Predicated region
        $region17: #{tpu_custom_call.1} parent=11 // pred_check
          %p140 = pneg %p94
        $region18: #{tpu_custom_call.1} parent=11 // pred_check_branch
          %142 = sbr.rel (%p140) target = $region20
        $region19: #{tpu_custom_call.1} parent=11 // pred_region
          _
        $region20: #{tpu_custom_call.1} parent=11 // pred_fallthru
          _
      $region12: #{tpu_custom_call.1} parent=5 // pred_fallthru
        _
      %p143 = scmp.lt.s32.totalorder %s12, 2
      // Predicated region
      $region21: #{tpu_custom_call.1} parent=5 // pred_check
        %p144 = pneg %p143
      $region22: #{tpu_custom_call.1} parent=5 // pred_check_branch
        %146 = sbr.rel (%p144) target = $region24
      $region23: #{tpu_custom_call.1} parent=5 // pred_region
        // Predicated region
        $region25: #{tpu_custom_call.1} parent=23 // pred_check
          %p147 = pneg %p46
        $region26: #{tpu_custom_call.1} parent=23 // pred_check_branch
          %149 = sbr.rel (%p147) target = $region28
        $region27: #{tpu_custom_call.1} parent=23 // pred_region
          %s150 = sand.u32 %s36, 1
          %s151 = scalar_lea.sflag [#allocation3], %s150
          %s152 = sand.u32 %s36, 1
          %s153 = smul.addr %s152, 256
          %s154 = scalar_lea.vmem [#allocation2], %s153
          %s155 = smul.u32 16, %s20
          %s157 = ssub.s32 4096, 4096
          %158 = vsyncadd %s151, %s157
          %s159 = smul.addr %s155, 2
          %s160 = smul.addr %s19, 32
          %s161 = sadd.s32 %s159, %s160
          %s162 = smul.addr %s161, 128
          %s163 = scalar_lea.hbm %s0, %s162
          %s164 = sshll.u32 %s154, 4
          %s165 = int_to_ptr.vmem [resolvable:$true] %s164
          %170 = dma.hbm_to_vmem [thread:$0]  %s163, 4096, %s165, %s151, 128, 128, 8
        $region28: #{tpu_custom_call.1} parent=23 // pred_fallthru
          _
      $region24: #{tpu_custom_call.1} parent=5 // pred_fallthru
        _
      %p171 = scmp.le.s32.totalorder 1, %s12
      %p172 = scmp.lt.s32.totalorder %s12, 3
      %p173 = pnand %p171, %p172
      %p174 = pneg %p173
      // Predicated region
      $region29: #{tpu_custom_call.1} parent=5 // pred_check
        _
      $region30: #{tpu_custom_call.1} parent=5 // pred_check_branch
        %176 = sbr.rel (%p173) target = $region32
      $region31: #{tpu_custom_call.1} parent=5 // pred_region
        %s177 = ssub.s32 %s12, 1
        %s178 = sand.u32 %s39, 1
        %s179 = scalar_lea.sflag [#allocation3], %s178
        %s180 = sand.u32 %s39, 1
        %s181 = smul.addr %s180, 256
        %s182 = scalar_lea.vmem [#allocation2], %s181
        // Predicated region
        $region33: #{tpu_custom_call.1} parent=31 // pred_check
          %p183 = pneg %p52
        $region34: #{tpu_custom_call.1} parent=31 // pred_check_branch
          %185 = sbr.rel (%p183) target = $region36
        $region35: #{tpu_custom_call.1} parent=31 // pred_region
          %186 = dma.done %s179, 4096
        $region36: #{tpu_custom_call.1} parent=31 // pred_fallthru
          _
        %s187 = sand.u32 %s39, 1
        %s188 = scalar_lea.sflag [#allocation3], %s187
        %s189 = sand.u32 %s39, 1
        %s190 = smul.addr %s189, 256
        %s191 = scalar_lea.vmem [#allocation2], %s190
        %p192 = pneg %p52
        %p193 = pneg %p49
        %p194 = pneg %p73
        %p195 = pneg %p70
        %p196 = pneg %p94
        %p197 = pneg %p91
        %p198 = pneg %p122
        %p199 = pneg %p119
        %s200 = smul.u32 16, %s22
        %p201 = scmp.lt.s32.totalorder %s21, 1
        %s202 = scalar_select %p201, %s21, 1
        %p203 = scmp.lt.s32.totalorder %s200, 15
        %s204 = scalar_select %p203, %s200, 15
        %s205 = smul.addr %s204, 2
        %s206 = smul.addr %s202, 32
        %s207 = sadd.s32 %s205, %s206
        %s208 = smul.addr %s207, 8
        %s209 = scalar_lea.vmem %s3, %s208
        %s210 = smul.u32 16, %s22
        %s211 = smul.u32 16, %s22
        %p212 = scmp.lt.s32.totalorder %s21, 1
        %s213 = scalar_select %p212, %s21, 1
        %p214 = scmp.lt.s32.totalorder %s211, 15
        %s215 = scalar_select %p214, %s211, 15
        %s216 = smul.addr %s215, 2
        %s217 = smul.addr %s213, 32
        %s218 = sadd.s32 %s216, %s217
        %s219 = smul.addr %s218, 8
        %s220 = scalar_lea.vmem %s3, %s219
        %s221 = smul.u32 16, %s22
        %v222 = vld [vmem:[%s182] sm:$0xff]
        %v223 = vld [vmem:[%s182 + $0x8] sm:$0xff]
        %v224 = vld [vmem:[%s182 + $0x10] sm:$0xff]
        %v225 = vld [vmem:[%s182 + $0x18] sm:$0xff]
        %v226 = vld [vmem:[%s182 + $0x20] sm:$0xff]
        %v227 = vld [vmem:[%s182 + $0x28] sm:$0xff]
        %v228 = vld [vmem:[%s182 + $0x30] sm:$0xff]
        %v229 = vld [vmem:[%s182 + $0x38] sm:$0xff]
        %v230 = vld [vmem:[%s182 + $0x40] sm:$0xff]
        %v231 = vld [vmem:[%s182 + $0x48] sm:$0xff]
        %v232 = vld [vmem:[%s182 + $0x50] sm:$0xff]
        %v233 = vld [vmem:[%s182 + $0x58] sm:$0xff]
        %v234 = vld [vmem:[%s182 + $0x60] sm:$0xff]
        %v235 = vld [vmem:[%s182 + $0x68] sm:$0xff]
        %v236 = vld [vmem:[%s182 + $0x70] sm:$0xff]
        %v237 = vld [vmem:[%s182 + $0x78] sm:$0xff]
        %v238 = vld [vmem:[%s182 + $0x80] sm:$0xff]
        %v239 = vld [vmem:[%s182 + $0x88] sm:$0xff]
        %v240 = vld [vmem:[%s182 + $0x90] sm:$0xff]
        %v241 = vld [vmem:[%s182 + $0x98] sm:$0xff]
        %v242 = vld [vmem:[%s182 + $0xa0] sm:$0xff]
        %v243 = vld [vmem:[%s182 + $0xa8] sm:$0xff]
        %v244 = vld [vmem:[%s182 + $0xb0] sm:$0xff]
        %v245 = vld [vmem:[%s182 + $0xb8] sm:$0xff]
        %v246 = vld [vmem:[%s182 + $0xc0] sm:$0xff]
        %v247 = vld [vmem:[%s182 + $0xc8] sm:$0xff]
        %v248 = vld [vmem:[%s182 + $0xd0] sm:$0xff]
        %v249 = vld [vmem:[%s182 + $0xd8] sm:$0xff]
        %v250 = vld [vmem:[%s182 + $0xe0] sm:$0xff]
        %v251 = vld [vmem:[%s182 + $0xe8] sm:$0xff]
        %v252 = vld [vmem:[%s182 + $0xf0] sm:$0xff]
        %v253 = vld [vmem:[%s182 + $0xf8] sm:$0xff]
        %v254 = vld [vmem:[%s1] sm:$0xff]
        %v255 = vld [vmem:[%s1 + $0x8] sm:$0xff]
        %v256 = vld [vmem:[%s1 + $0x10] sm:$0xff]
        %v257 = vld [vmem:[%s1 + $0x18] sm:$0xff]
        %v258 = vld [vmem:[%s1 + $0x20] sm:$0xf]
        %v259 = vld [vmem:[%s2] sm:$0x1]
        %v261 = vlaneseq
        %v262 = vshrl.u32 %v261, 7
        %v263 = vsub.s32 0, %v262
        %v264 = vrot.slane %v259, %v263
        %vm266 = vcmask 293888
        %v268 = vsel %vm266, %v222, 0
        %v271 = vsel %vm266, %v223, 0
        %v274 = vsel %vm266, %v224, 0
        %v277 = vsel %vm266, %v225, 0
        %v280 = vsel %vm266, %v226, 0
        %v283 = vsel %vm266, %v227, 0
        %v286 = vsel %vm266, %v228, 0
        %v289 = vsel %vm266, %v229, 0
        %v292 = vsel %vm266, %v230, 0
        %v295 = vsel %vm266, %v231, 0
        %v298 = vsel %vm266, %v232, 0
        %v301 = vsel %vm266, %v233, 0
        %v304 = vsel %vm266, %v234, 0
        %v307 = vsel %vm266, %v235, 0
        %v310 = vsel %vm266, %v236, 0
        %v313 = vsel %vm266, %v237, 0
        %v316 = vsel %vm266, %v238, 0
        %v319 = vsel %vm266, %v239, 0
        %v322 = vsel %vm266, %v240, 0
        %v325 = vsel %vm266, %v241, 0
        %v328 = vsel %vm266, %v242, 0
        %v331 = vsel %vm266, %v243, 0
        %v334 = vsel %vm266, %v244, 0
        %v337 = vsel %vm266, %v245, 0
        %v340 = vsel %vm266, %v246, 0
        %v343 = vsel %vm266, %v247, 0
        %v346 = vsel %vm266, %v248, 0
        %v349 = vsel %vm266, %v249, 0
        %v352 = vsel %vm266, %v250, 0
        %v355 = vsel %vm266, %v251, 0
        %v358 = vsel %vm266, %v252, 0
        %v361 = vsel %vm266, %v253, 0
        %vm363 = vcmask 1043456
        %v365 = vsel %vm363, %v258, 0
        %367 = vmatprep.subr.mxu0 0.0
        %368 = vmatpush1.msra.mxu0 0.0
        %369 = vmatprep.subr.mxu0 0.0
        %370 = vmatpush1.msra.mxu0 0.0
        %371 = vmatprep.subr.mxu0 0.0
        %372 = vmatpush1.msra.mxu0 0.0
        %373 = vmatprep.subr.mxu0 0.0
        %374 = vmatpush1.msra.mxu0 0.0
        %375 = vmatprep.subr.mxu0 0.0
        %376 = vmatpush1.msra.mxu0 0.0
        %377 = vmatprep.subr.mxu0 0.0
        %378 = vmatpush1.msra.mxu0 0.0
        %379 = vmatprep.subr.mxu0 0.0
        %380 = vmatpush1.msra.mxu0 0.0
        %381 = vmatprep.subr.mxu0 0.0
        %382 = vmatpush1.msra.mxu0 0.0
        %383 = vmatprep.subr.mxu0 0.0
        %384 = vmatpush1.msra.mxu0 0.0
        %385 = vmatprep.subr.mxu0 0.0
        %386 = vmatpush1.msra.mxu0 0.0
        %387 = vmatprep.subr.mxu0 0.0
        %388 = vmatpush1.msra.mxu0 0.0
        %389 = vmatprep.subr.mxu0 0.0
        %390 = vmatpush1.msra.mxu0 %v365
        %391 = vmatprep.subr.mxu0 0.0
        %392 = vmatpush1.msra.mxu0 %v257
        %393 = vmatprep.subr.mxu0 0.0
        %394 = vmatpush1.msra.mxu0 %v256
        %395 = vmatprep.subr.mxu0 0.0
        %396 = vmatpush1.msra.mxu0 %v255
        %397 = vmatprep.subr.mxu0 0.0
        %398 = vmatpush1.msra.mxu0 %v254
        %399 = vmatprep.subr.mxu0 0.0
        %400 = vmatpush2.msra.mxu0 0.0
        %401 = vmatprep.subr.mxu0 0.0
        %402 = vmatpush2.msra.mxu0 0.0
        %403 = vmatprep.subr.mxu0 0.0
        %404 = vmatpush2.msra.mxu0 0.0
        %405 = vmatprep.subr.mxu0 0.0
        %406 = vmatpush2.msra.mxu0 0.0
        %407 = vmatprep.subr.mxu0 0.0
        %408 = vmatpush2.msra.mxu0 0.0
        %409 = vmatprep.subr.mxu0 0.0
        %410 = vmatpush2.msra.mxu0 0.0
        %411 = vmatprep.subr.mxu0 0.0
        %412 = vmatpush2.msra.mxu0 0.0
        %413 = vmatprep.subr.mxu0 0.0
        %414 = vmatpush2.msra.mxu0 0.0
        %415 = vmatprep.subr.mxu0 0.0
        %416 = vmatpush2.msra.mxu0 0.0
        %417 = vmatprep.subr.mxu0 0.0
        %418 = vmatpush2.msra.mxu0 0.0
        %419 = vmatprep.subr.mxu0 0.0
        %420 = vmatpush2.msra.mxu0 0.0
        %421 = vmatprep.subr.mxu0 0.0
        %422 = vmatpush2.msra.mxu0 0.0
        %423 = vmatprep.subr.mxu0 0.0
        %424 = vmatpush2.msra.mxu0 0.0
        %425 = vmatprep.subr.mxu0 0.0
        %426 = vmatpush2.msra.mxu0 0.0
        %427 = vmatprep.subr.mxu0 0.0
        %428 = vmatpush2.msra.mxu0 0.0
        %429 = vmatprep.subr.mxu0 0.0
        %430 = vmatpush2.msra.mxu0 0.0
        %431 = vmatprep.mubr.f32.mxu0 0.0
        %432 = vmatmul.mubr.f32.gmra.mxu0 %v268
        %v433 = vpop.f32.mrf.mxu0
        %v434 = vadd.f32 %v264, %v433
        %v435 = vpop.f32.mrf.mxu0
        %436 = vmatprep.mubr.f32.mxu0 0.0
        %437 = vmatmul.mubr.f32.gmra.mxu0 %v271
        %v438 = vpop.f32.mrf.mxu0
        %v439 = vadd.f32 %v264, %v438
        %v440 = vpop.f32.mrf.mxu0
        %441 = vmatprep.mubr.f32.mxu0 0.0
        %442 = vmatmul.mubr.f32.gmra.mxu0 %v274
        %v443 = vpop.f32.mrf.mxu0
        %v444 = vadd.f32 %v264, %v443
        %v445 = vpop.f32.mrf.mxu0
        %446 = vmatprep.mubr.f32.mxu0 0.0
        %447 = vmatmul.mubr.f32.gmra.mxu0 %v277
        %v448 = vpop.f32.mrf.mxu0
        %v449 = vadd.f32 %v264, %v448
        %v450 = vpop.f32.mrf.mxu0
        %451 = vmatprep.mubr.f32.mxu0 0.0
        %452 = vmatmul.mubr.f32.gmra.mxu0 %v280
        %v453 = vpop.f32.mrf.mxu0
        %v454 = vadd.f32 %v264, %v453
        %v455 = vpop.f32.mrf.mxu0
        %456 = vmatprep.mubr.f32.mxu0 0.0
        %457 = vmatmul.mubr.f32.gmra.mxu0 %v283
        %v458 = vpop.f32.mrf.mxu0
        %v459 = vadd.f32 %v264, %v458
        %v460 = vpop.f32.mrf.mxu0
        %461 = vmatprep.mubr.f32.mxu0 0.0
        %462 = vmatmul.mubr.f32.gmra.mxu0 %v286
        %v463 = vpop.f32.mrf.mxu0
        %v464 = vadd.f32 %v264, %v463
        %v465 = vpop.f32.mrf.mxu0
        %466 = vmatprep.mubr.f32.mxu0 0.0
        %467 = vmatmul.mubr.f32.gmra.mxu0 %v289
        %v468 = vpop.f32.mrf.mxu0
        %v469 = vadd.f32 %v264, %v468
        %v470 = vpop.f32.mrf.mxu0
        %471 = vmatprep.mubr.f32.mxu0 0.0
        %472 = vmatmul.mubr.f32.gmra.mxu0 %v292
        %v473 = vpop.f32.mrf.mxu0
        %v474 = vadd.f32 %v264, %v473
        %v475 = vpop.f32.mrf.mxu0
        %476 = vmatprep.mubr.f32.mxu0 0.0
        %477 = vmatmul.mubr.f32.gmra.mxu0 %v295
        %v478 = vpop.f32.mrf.mxu0
        %v479 = vadd.f32 %v264, %v478
        %v480 = vpop.f32.mrf.mxu0
        %481 = vmatprep.mubr.f32.mxu0 0.0
        %482 = vmatmul.mubr.f32.gmra.mxu0 %v298
        %v483 = vpop.f32.mrf.mxu0
        %v484 = vadd.f32 %v264, %v483
        %v485 = vpop.f32.mrf.mxu0
        %486 = vmatprep.mubr.f32.mxu0 0.0
        %487 = vmatmul.mubr.f32.gmra.mxu0 %v301
        %v488 = vpop.f32.mrf.mxu0
        %v489 = vadd.f32 %v264, %v488
        %v490 = vpop.f32.mrf.mxu0
        %491 = vmatprep.mubr.f32.mxu0 0.0
        %492 = vmatmul.mubr.f32.gmra.mxu0 %v304
        %v493 = vpop.f32.mrf.mxu0
        %v494 = vadd.f32 %v264, %v493
        %v495 = vpop.f32.mrf.mxu0
        %496 = vmatprep.mubr.f32.mxu0 0.0
        %497 = vmatmul.mubr.f32.gmra.mxu0 %v307
        %v498 = vpop.f32.mrf.mxu0
        %v499 = vadd.f32 %v264, %v498
        %v500 = vpop.f32.mrf.mxu0
        %501 = vmatprep.mubr.f32.mxu0 0.0
        %502 = vmatmul.mubr.f32.gmra.mxu0 %v310
        %v503 = vpop.f32.mrf.mxu0
        %v504 = vadd.f32 %v264, %v503
        %v505 = vpop.f32.mrf.mxu0
        %506 = vmatprep.mubr.f32.mxu0 0.0
        %507 = vmatmul.mubr.f32.gmra.mxu0 %v313
        %v508 = vpop.f32.mrf.mxu0
        %v509 = vadd.f32 %v264, %v508
        %v510 = vpop.f32.mrf.mxu0
        %511 = vmatprep.mubr.f32.mxu0 0.0
        %512 = vmatmul.mubr.f32.gmra.mxu0 %v316
        %v513 = vpop.f32.mrf.mxu0
        %v514 = vadd.f32 %v264, %v513
        %v515 = vpop.f32.mrf.mxu0
        %516 = vmatprep.mubr.f32.mxu0 0.0
        %517 = vmatmul.mubr.f32.gmra.mxu0 %v319
        %v518 = vpop.f32.mrf.mxu0
        %v519 = vadd.f32 %v264, %v518
        %v520 = vpop.f32.mrf.mxu0
        %521 = vmatprep.mubr.f32.mxu0 0.0
        %522 = vmatmul.mubr.f32.gmra.mxu0 %v322
        %v523 = vpop.f32.mrf.mxu0
        %v524 = vadd.f32 %v264, %v523
        %v525 = vpop.f32.mrf.mxu0
        %526 = vmatprep.mubr.f32.mxu0 0.0
        %527 = vmatmul.mubr.f32.gmra.mxu0 %v325
        %v528 = vpop.f32.mrf.mxu0
        %v529 = vadd.f32 %v264, %v528
        %v530 = vpop.f32.mrf.mxu0
        %531 = vmatprep.mubr.f32.mxu0 0.0
        %532 = vmatmul.mubr.f32.gmra.mxu0 %v328
        %v533 = vpop.f32.mrf.mxu0
        %v534 = vadd.f32 %v264, %v533
        %v535 = vpop.f32.mrf.mxu0
        %536 = vmatprep.mubr.f32.mxu0 0.0
        %537 = vmatmul.mubr.f32.gmra.mxu0 %v331
        %v538 = vpop.f32.mrf.mxu0
        %v539 = vadd.f32 %v264, %v538
        %v540 = vpop.f32.mrf.mxu0
        %541 = vmatprep.mubr.f32.mxu0 0.0
        %542 = vmatmul.mubr.f32.gmra.mxu0 %v334
        %v543 = vpop.f32.mrf.mxu0
        %v544 = vadd.f32 %v264, %v543
        %v545 = vpop.f32.mrf.mxu0
        %546 = vmatprep.mubr.f32.mxu0 0.0
        %547 = vmatmul.mubr.f32.gmra.mxu0 %v337
        %v548 = vpop.f32.mrf.mxu0
        %v549 = vadd.f32 %v264, %v548
        %v550 = vpop.f32.mrf.mxu0
        %551 = vmatprep.mubr.f32.mxu0 0.0
        %552 = vmatmul.mubr.f32.gmra.mxu0 %v340
        %v553 = vpop.f32.mrf.mxu0
        %v554 = vadd.f32 %v264, %v553
        %v555 = vpop.f32.mrf.mxu0
        %556 = vmatprep.mubr.f32.mxu0 0.0
        %557 = vmatmul.mubr.f32.gmra.mxu0 %v343
        %v558 = vpop.f32.mrf.mxu0
        %v559 = vadd.f32 %v264, %v558
        %v560 = vpop.f32.mrf.mxu0
        %561 = vmatprep.mubr.f32.mxu0 0.0
        %562 = vmatmul.mubr.f32.gmra.mxu0 %v346
        %v563 = vpop.f32.mrf.mxu0
        %v564 = vadd.f32 %v264, %v563
        %v565 = vpop.f32.mrf.mxu0
        %566 = vmatprep.mubr.f32.mxu0 0.0
        %567 = vmatmul.mubr.f32.gmra.mxu0 %v349
        %v568 = vpop.f32.mrf.mxu0
        %v569 = vadd.f32 %v264, %v568
        %v570 = vpop.f32.mrf.mxu0
        %571 = vmatprep.mubr.f32.mxu0 0.0
        %572 = vmatmul.mubr.f32.gmra.mxu0 %v352
        %v573 = vpop.f32.mrf.mxu0
        %v574 = vadd.f32 %v264, %v573
        %v575 = vpop.f32.mrf.mxu0
        %576 = vmatprep.mubr.f32.mxu0 0.0
        %577 = vmatmul.mubr.f32.gmra.mxu0 %v355
        %v578 = vpop.f32.mrf.mxu0
        %v579 = vadd.f32 %v264, %v578
        %v580 = vpop.f32.mrf.mxu0
        %581 = vmatprep.mubr.f32.mxu0 0.0
        %582 = vmatmul.mubr.f32.gmra.mxu0 %v358
        %v583 = vpop.f32.mrf.mxu0
        %v584 = vadd.f32 %v264, %v583
        %v585 = vpop.f32.mrf.mxu0
        %586 = vmatprep.mubr.f32.mxu0 0.0
        %587 = vmatmul.mubr.f32.gmra.mxu0 %v361
        %v588 = vpop.f32.mrf.mxu0
        %v589 = vadd.f32 %v264, %v588
        %v590 = vpop.f32.mrf.mxu0
        %591 = vdwg.mxu0
        %v592 = vmax.f32 %v434, 0.0
        %v593 = vmax.f32 %v439, 0.0
        %v594 = vmax.f32 %v444, 0.0
        %v595 = vmax.f32 %v449, 0.0
        %v596 = vmax.f32 %v454, 0.0
        %v597 = vmax.f32 %v459, 0.0
        %v598 = vmax.f32 %v464, 0.0
        %v599 = vmax.f32 %v469, 0.0
        %v600 = vmax.f32 %v474, 0.0
        %v601 = vmax.f32 %v479, 0.0
        %v602 = vmax.f32 %v484, 0.0
        %v603 = vmax.f32 %v489, 0.0
        %v604 = vmax.f32 %v494, 0.0
        %v605 = vmax.f32 %v499, 0.0
        %v606 = vmax.f32 %v504, 0.0
        %v607 = vmax.f32 %v509, 0.0
        %v608 = vmax.f32 %v514, 0.0
        %v609 = vmax.f32 %v519, 0.0
        %v610 = vmax.f32 %v524, 0.0
        %v611 = vmax.f32 %v529, 0.0
        %v612 = vmax.f32 %v534, 0.0
        %v613 = vmax.f32 %v539, 0.0
        %v614 = vmax.f32 %v544, 0.0
        %v615 = vmax.f32 %v549, 0.0
        %v616 = vmax.f32 %v554, 0.0
        %v617 = vmax.f32 %v559, 0.0
        %v618 = vmax.f32 %v564, 0.0
        %v619 = vmax.f32 %v569, 0.0
        %v620 = vmax.f32 %v574, 0.0
        %v621 = vmax.f32 %v579, 0.0
        %v622 = vmax.f32 %v584, 0.0
        %v623 = vmax.f32 %v589, 0.0
        %vm624 = vcmask 64512
        %625 = vst.msk [vmem:[%s220] sm:$0xff] %vm624, %v592
        %626 = vst.msk [vmem:[%s220 + $0x8] sm:$0xff] %vm624, %v593
        %627 = vst.msk [vmem:[%s220 + $0x10] sm:$0xff] %vm624, %v594
        %628 = vst.msk [vmem:[%s220 + $0x18] sm:$0xff] %vm624, %v595
        %629 = vst.msk [vmem:[%s220 + $0x20] sm:$0xff] %vm624, %v596
        %630 = vst.msk [vmem:[%s220 + $0x28] sm:$0xff] %vm624, %v597
        %631 = vst.msk [vmem:[%s220 + $0x30] sm:$0xff] %vm624, %v598
        %632 = vst.msk [vmem:[%s220 + $0x38] sm:$0xff] %vm624, %v599
        %633 = vst.msk [vmem:[%s220 + $0x40] sm:$0xff] %vm624, %v600
        %634 = vst.msk [vmem:[%s220 + $0x48] sm:$0xff] %vm624, %v601
        %635 = vst.msk [vmem:[%s220 + $0x50] sm:$0xff] %vm624, %v602
        %636 = vst.msk [vmem:[%s220 + $0x58] sm:$0xff] %vm624, %v603
        %637 = vst.msk [vmem:[%s220 + $0x60] sm:$0xff] %vm624, %v604
        %638 = vst.msk [vmem:[%s220 + $0x68] sm:$0xff] %vm624, %v605
        %639 = vst.msk [vmem:[%s220 + $0x70] sm:$0xff] %vm624, %v606
        %640 = vst.msk [vmem:[%s220 + $0x78] sm:$0xff] %vm624, %v607
        %641 = vst.msk [vmem:[%s220 + $0x80] sm:$0xff] %vm624, %v608
        %642 = vst.msk [vmem:[%s220 + $0x88] sm:$0xff] %vm624, %v609
        %643 = vst.msk [vmem:[%s220 + $0x90] sm:$0xff] %vm624, %v610
        %644 = vst.msk [vmem:[%s220 + $0x98] sm:$0xff] %vm624, %v611
        %645 = vst.msk [vmem:[%s220 + $0xa0] sm:$0xff] %vm624, %v612
        %646 = vst.msk [vmem:[%s220 + $0xa8] sm:$0xff] %vm624, %v613
        %647 = vst.msk [vmem:[%s220 + $0xb0] sm:$0xff] %vm624, %v614
        %648 = vst.msk [vmem:[%s220 + $0xb8] sm:$0xff] %vm624, %v615
        %649 = vst.msk [vmem:[%s220 + $0xc0] sm:$0xff] %vm624, %v616
        %650 = vst.msk [vmem:[%s220 + $0xc8] sm:$0xff] %vm624, %v617
        %651 = vst.msk [vmem:[%s220 + $0xd0] sm:$0xff] %vm624, %v618
        %652 = vst.msk [vmem:[%s220 + $0xd8] sm:$0xff] %vm624, %v619
        %653 = vst.msk [vmem:[%s220 + $0xe0] sm:$0xff] %vm624, %v620
        %654 = vst.msk [vmem:[%s220 + $0xe8] sm:$0xff] %vm624, %v621
        %655 = vst.msk [vmem:[%s220 + $0xf0] sm:$0xff] %vm624, %v622
        %656 = vst.msk [vmem:[%s220 + $0xf8] sm:$0xff] %vm624, %v623
        %s657 = smul.u32 16, %s22
        %p658 = scmp.lt.s32.totalorder %s21, 1
        %s659 = scalar_select %p658, %s21, 1
        %p660 = scmp.lt.s32.totalorder %s657, 15
        %s661 = scalar_select %p660, %s657, 15
        %s662 = smul.addr %s661, 2
        %s663 = smul.addr %s659, 32
        %s664 = sadd.s32 %s662, %s663
        %s665 = smul.addr %s664, 8
        %s666 = scalar_lea.vmem %s3, %s665
        // Predicated region
        $region37: #{tpu_custom_call.1} parent=31 // pred_check
          %p667 = pneg %p119
        $region38: #{tpu_custom_call.1} parent=31 // pred_check_branch
          %669 = sbr.rel (%p667) target = $region40
        $region39: #{tpu_custom_call.1} parent=31 // pred_region
          %s670 = smul.u32 16, %s22
        $region40: #{tpu_custom_call.1} parent=31 // pred_fallthru
          _
      $region32: #{tpu_custom_call.1} parent=5 // pred_fallthru
        _
      %p671 = scmp.le.s32.totalorder 2, %s12
      // Predicated region
      $region41: #{tpu_custom_call.1} parent=5 // pred_check
        %p672 = pneg %p671
      $region42: #{tpu_custom_call.1} parent=5 // pred_check_branch
        %674 = sbr.rel (%p672) target = $region44
      $region43: #{tpu_custom_call.1} parent=5 // pred_region
        %s675 = ssub.s32 %s12, 2
        // Predicated region
        $region45: #{tpu_custom_call.1} parent=43 // pred_check
          %p676 = pneg %p125
        $region46: #{tpu_custom_call.1} parent=43 // pred_check_branch
          %678 = sbr.rel (%p676) target = $region48
        $region47: #{tpu_custom_call.1} parent=43 // pred_region
          %s679 = smul.u32 16, %s24
          %p680 = scmp.lt.s32.totalorder %s23, 1
          %s681 = scalar_select %p680, %s23, 1
          %p682 = scmp.lt.s32.totalorder %s679, 15
          %s683 = scalar_select %p682, %s679, 15
          %s684 = smul.addr %s683, 2
          %s685 = smul.addr %s681, 32
          %s686 = sadd.s32 %s684, %s685
          %s687 = smul.addr %s686, 8
          %s688 = scalar_lea.vmem %s3, %s687
        $region48: #{tpu_custom_call.1} parent=43 // pred_fallthru
          _
      $region44: #{tpu_custom_call.1} parent=5 // pred_fallthru
        _
    $region6: #{tpu_custom_call.1} parent=1 // loop_footer
      %s16 = sadd.s32 1, %s12
    $region7: #{tpu_custom_call.1} parent=1 // loop_footer_branch
      %11 = sbr.rel target = $region3
    $region8: #{tpu_custom_call.1} parent=1 // loop_exit
      _
    %689 = vsyncpa [#allocation3], 1
    %s690 = scalar_lea.sflag [#allocation3], 1
    %691 = vsyncpa %s690, 1

</llo_original>
